<compile_context>
chip_gen: v6e
topology: v6e:2x2x1
jax: 0.10.0
libtpu: 0.0.40
codegen_flags: <defaults>
</compile_context>

<pallas_src>
import jax
import jax.numpy as jnp
from jax.experimental import pallas as pl
from jax.experimental.pallas import tpu as pltpu


def outconv_kernel(x_ref, w_ref, b_ref, o_ref):
    # x_ref: (1, Cin, tile)   w_ref: (Cout, Cin)   b_ref: (Cout, 1)
    x = x_ref[0]                                     # (Cin, tile)
    acc = jnp.dot(w_ref[...], x, preferred_element_type=jnp.float32)
    o_ref[0] = (acc + b_ref[...]).astype(o_ref.dtype)   # broadcast bias over lanes


def _pick_hw_tile(hw: int) -> int:
    # Largest lane-dense tile (multiple of 128) that divides HW; otherwise
    # fall back to the full extent (still legal: full-array dim).
    for cand in (2048, 1024, 512, 256, 128):
        if hw % cand == 0:
            return cand
    return hw


def outconv_forward(x, weight, bias):
    """x: (B, Cin, H, W), weight: (Cout, Cin, 1, 1), bias: (Cout,)."""
    B, Cin, H, W = x.shape
    Cout = weight.shape[0]
    HW = H * W
    tile = _pick_hw_tile(HW)

    x_r = x.reshape(B, Cin, HW)                      # lane-dense last dim
    w2 = weight.reshape(Cout, Cin).astype(jnp.float32)
    b2 = bias.reshape(Cout, 1).astype(jnp.float32)

    out = pl.pallas_call(
        outconv_kernel,
        out_shape=jax.ShapeDtypeStruct((B, Cout, HW), x.dtype),
        grid_spec=pltpu.PrefetchScalarGridSpec(
            num_scalar_prefetch=0,
            grid=(B, HW // tile),
            in_specs=[
                pl.BlockSpec((1, Cin, tile), lambda b, t: (b, 0, t)),
                pl.BlockSpec((Cout, Cin), lambda b, t: (0, 0)),
                pl.BlockSpec((Cout, 1), lambda b, t: (0, 0)),
            ],
            out_specs=pl.BlockSpec((1, Cout, tile), lambda b, t: (b, 0, t)),
        ),
        compiler_params=pltpu.CompilerParams(
            dimension_semantics=("parallel", "parallel")),
    )(x_r, w2, b2)
    return out.reshape(B, Cout, H, W)


def outconv_reference(x, weight, bias):
    """Pure-JAX reference (mirrors nn.Conv2d(kernel_size=1))."""
    w2 = weight.reshape(weight.shape[0], weight.shape[1])
    out = jnp.einsum("bihw,oi->bohw", x, w2)
    return out + bias[None, :, None, None]


if __name__ == "__main__":
    B, Cin, Cout, H, W = 2, 4, 2, 16, 16

    key = jax.random.PRNGKey(0)
    kx, kw, kb = jax.random.split(key, 3)

    x = jax.random.normal(kx, (B, Cin, H, W), jnp.float32)
    # PyTorch Conv2d weight shape: (out_channels, in_channels, 1, 1), plus bias.
    weight = jax.random.normal(kw, (Cout, Cin, 1, 1), jnp.float32) * 0.1
    bias = jax.random.normal(kb, (Cout,), jnp.float32) * 0.1

    out = outconv_forward(x, weight, bias)
    out = jax.block_until_ready(out)

    ref = outconv_reference(x, weight, bias)
    ref = jax.block_until_ready(ref)

    assert out.shape == (B, Cout, H, W)
    assert jnp.allclose(out, ref, rtol=1e-5, atol=1e-5), (
        f"max abs err = {float(jnp.max(jnp.abs(out - ref)))}")

    print("KERNEL_OK")
</pallas_src>

<mosaic_0001>
module attributes {stable_mosaic.version = 11 : i64} {
  func.func @outconv_kernel(%arg0: i32, %arg1: i32, %arg2: memref<1x4x256xf32, #tpu.memory_space<vmem>>, %arg3: memref<2x4xf32, #tpu.memory_space<vmem>>, %arg4: memref<2x1xf32, #tpu.memory_space<vmem>>, %arg5: memref<1x2x256xf32, #tpu.memory_space<vmem>>) attributes {dimension_semantics = [#tpu.dimension_semantics<parallel>, #tpu.dimension_semantics<parallel>], iteration_bounds = array<i64: 2, 1>, scalar_prefetch = 0 : i64, scratch_operands = 0 : i64, tpu.core_type = #tpu.core_type<tc>, window_params = [{transform_indices = @transform_0, window_bounds = array<i64: 1, 4, 256>}, {pipeline_mode = #tpu.pipeline_mode<synchronous>, transform_indices = @transform_1, window_bounds = array<i64: 2, 4>}, {pipeline_mode = #tpu.pipeline_mode<synchronous>, transform_indices = @transform_2, window_bounds = array<i64: 2, 1>}, {transform_indices = @transform_3, window_bounds = array<i64: 1, 2, 256>}]} {
    %c0 = arith.constant 0 : index
    %c0_0 = arith.constant 0 : index
    %c0_1 = arith.constant 0 : index
    %0 = vector.load %arg2[%c0, %c0_0, %c0_1] : memref<1x4x256xf32, #tpu.memory_space<vmem>>, vector<1x4x256xf32>
    %1 = vector.shape_cast %0 : vector<1x4x256xf32> to vector<4x256xf32>
    %c0_2 = arith.constant 0 : index
    %c0_3 = arith.constant 0 : index
    %2 = vector.load %arg3[%c0_2, %c0_3] : memref<2x4xf32, #tpu.memory_space<vmem>>, vector<2x4xf32>
    %cst = arith.constant dense<0.000000e+00> : vector<2x256xf32>
    %3 = tpu.matmul %2, %1, %cst {dimension_numbers = #tpu.dot_dimension_numbers<[1], [0], [0], [1], [0, 0, 1, 1], [], []>} : vector<2x4xf32>, vector<4x256xf32>, vector<2x256xf32> -> vector<2x256xf32>
    %c0_4 = arith.constant 0 : index
    %c0_5 = arith.constant 0 : index
    %4 = vector.load %arg4[%c0_4, %c0_5] : memref<2x1xf32, #tpu.memory_space<vmem>>, vector<2x1xf32>
    %5 = vector.broadcast %4 : vector<2x1xf32> to vector<2x256xf32>
    %6 = arith.addf %3, %5 : vector<2x256xf32>
    %c0_6 = arith.constant 0 : index
    %c0_7 = arith.constant 0 : index
    %c0_8 = arith.constant 0 : index
    %7 = vector.load %arg5[%c0_6, %c0_7, %c0_8] : memref<1x2x256xf32, #tpu.memory_space<vmem>>, vector<1x2x256xf32>
    %8 = vector.shape_cast %7 : vector<1x2x256xf32> to vector<2x256xf32>
    %9 = vector.shape_cast %6 : vector<2x256xf32> to vector<1x2x256xf32>
    tpu.vector_store %arg5[%c0_6, %c0_7, %c0_8], %9 {strides = array<i32>} : memref<1x2x256xf32, #tpu.memory_space<vmem>>, vector<1x2x256xf32>,
    return
  }
  func.func @transform_0(%arg0: i32, %arg1: i32) -> (i32, i32, i32) {
    %c0_i32 = arith.constant 0 : i32
    %c0_i32_0 = arith.constant 0 : i32
    return %arg0, %c0_i32, %arg1 : i32, i32, i32
  }
  func.func @transform_1(%arg0: i32, %arg1: i32) -> (i32, i32) {
    %c0_i32 = arith.constant 0 : i32
    %c0_i32_0 = arith.constant 0 : i32
    %c0_i32_1 = arith.constant 0 : i32
    return %c0_i32, %c0_i32_0 : i32, i32
  }
  func.func @transform_2(%arg0: i32, %arg1: i32) -> (i32, i32) {
    %c0_i32 = arith.constant 0 : i32
    %c0_i32_0 = arith.constant 0 : i32
    %c0_i32_1 = arith.constant 0 : i32
    return %c0_i32, %c0_i32_0 : i32, i32
  }
  func.func @transform_3(%arg0: i32, %arg1: i32) -> (i32, i32, i32) {
    %c0_i32 = arith.constant 0 : i32
    %c0_i32_0 = arith.constant 0 : i32
    return %arg0, %c0_i32, %arg1 : i32, i32, i32
  }
}

</mosaic_0001>

<llo_original>
// kernel: tpu_custom_call.1
$region0: #{tpu_custom_call.1}
  #allocation0 [shape = 'u32[]', space=smem, size = 0x4, offset = 0x4, fixed_abs, tag = 'smem constant byte address 0x4 - core index']
  #allocation1 [shape = 'u32[144,128]{1,0:T(1,128)}', space=vmem, size = 0x12000, scoped, tag = 'internal scratch']
  %s0 = inlined_call_operand.hbm [shape: f32[2,4,256], index: 0, kind: input, shape index: {}]
  %s1 = inlined_call_operand.vmem [shape: f32[2,4], index: 1, kind: input, shape index: {}]
  %s2 = inlined_call_operand.vmem [shape: f32[2,1], index: 2, kind: input, shape index: {}]
  %s3 = inlined_call_operand.hbm [shape: f32[2,2,256], index: 3, kind: output, shape index: {}]
  %s4 = sld [smem:[#allocation0]]
  $region49: #{tpu_custom_call.1} parent=0
    _
  %s6 = ssub.s32 1, %s4
  %s7 = scalar_select 0, %s6, %s4
  $region1: #{tpu_custom_call.1} parent=0
    #allocation2 [shape = 'u8[8192]{0}', space=vmem, size = 0x2000, scoped, tag = 'input window, operand 0']
    #allocation3 [shape = 's32[2]{0}', space=sflag, size = 0x8, scoped, tag = 'scoped memory for tpu_custom_call.1']
    #allocation4 [shape = 's32[2]{0}', space=sflag, size = 0x8, scoped, tag = 'scoped memory for tpu_custom_call.1']
    #allocation5 [shape = 'u8[4096]{0}', space=vmem, size = 0x1000, scoped, tag = 'output window, operand 0']
    %8 = vsyncpa [#allocation3], 0
    %s9 = scalar_lea.sflag [#allocation3], 1
    %10 = vsyncpa %s9, 0
    %11 = vsyncpa [#allocation4], 0
    %s12 = scalar_lea.sflag [#allocation4], 1
    %13 = vsyncpa %s12, 0
    loop: start=0, step=1, limit=4
    $region2: #{tpu_custom_call.1} parent=1 // loop_pre_header
      _
    $region3: #{tpu_custom_call.1} parent=1 // loop_header
      %s15 = sphi 0, %s19
      %p16 = scmp.ge.s32.totalorder %s15, 4
      %s22 = sphi 0, %s34
      %s23 = sphi 0, %s30
      %s24 = sphi 0, %s22
      %s25 = sphi 0, %s23
      %s26 = sphi 0, %s24
      %s27 = sphi 0, %s25
      %s39 = sphi 0, %s41
      %s42 = sphi 0, %s39
      %s43 = sphi 0, %s42
      %s59 = sphi 0, %s43
      %s63 = sphi 0, %s63
      %s65 = sphi 0, %s63
      %s66 = sphi 0, %s65
      %s80 = sphi 0, %s66
      %s84 = sphi 0, %s84
      %s86 = sphi 0, %s84
      %s87 = sphi 0, %s86
      %s101 = sphi 0, %s87
      %s109 = sphi 0, %s111
      %s112 = sphi 0, %s109
      %s113 = sphi 0, %s112
      %s129 = sphi 0, %s113
    $region4: #{tpu_custom_call.1} parent=1 // loop_header_branch
      %18 = sbr.rel (%p16) target = $region8
    $region5: #{tpu_custom_call.1} parent=1 // loop_body
      %s20 = ssub.s32 %s15, 1
      %s21 = ssub.s32 %s15, 2
      %s28 = sadd.s32 1, %s23
      %p29 = scmp.ge.s32.totalorder %s28, 1
      %s30 = scalar_select %p29, 0, %s28
      %s31 = sadd.s32 1, %s22
      %s32 = scalar_select %p29, %s31, %s22
      %p33 = scmp.ge.s32.totalorder %s32, 2
      %s34 = scalar_select %p33, 0, %s32
      %s35 = ssub.s32 %s22, %s34
      %s36 = ssub.s32 %s23, %s30
      %s37 = sor.u32 %s35, %s36
      %p38 = scmp.eq.s32.totalorder %s37, 0
      %s40 = sadd.s32 %s39, 1
      %s41 = scalar_select %p38, %s39, %s40
      %p44 = pneg %p38
      %p45 = scmp.eq.s32.totalorder %s15, 1
      %p46 = por %p44, %p45
      %p47 = scmp.ne.s32.totalorder %s39, %s42
      %p48 = scmp.eq.s32.totalorder %s15, 0
      %p49 = por %p47, %p48
      %p50 = scmp.ne.s32.totalorder %s39, %s42
      %p51 = scmp.eq.s32.totalorder %s20, 1
      %p52 = por %p50, %p51
      %p53 = scmp.ne.s32.totalorder %s42, %s43
      %p54 = scmp.eq.s32.totalorder %s20, 0
      %p55 = por %p53, %p54
      %p56 = scmp.ne.s32.totalorder %s42, %s43
      %p57 = scmp.eq.s32.totalorder %s21, 1
      %p58 = por %p56, %p57
      %p60 = scmp.ne.s32.totalorder %s43, %s59
      %p61 = scmp.eq.s32.totalorder %s21, 0
      %p62 = por %p60, %p61
      %s64 = sadd.s32 %s63, 1
      %p67 = scmp.eq.s32.totalorder %s15, 1
      %p68 = scmp.ne.s32.totalorder %s63, %s65
      %p69 = scmp.eq.s32.totalorder %s15, 0
      %p70 = por %p68, %p69
      %p71 = scmp.ne.s32.totalorder %s63, %s65
      %p72 = scmp.eq.s32.totalorder %s20, 1
      %p73 = por %p71, %p72
      %p74 = scmp.ne.s32.totalorder %s65, %s66
      %p75 = scmp.eq.s32.totalorder %s20, 0
      %p76 = por %p74, %p75
      %p77 = scmp.ne.s32.totalorder %s65, %s66
      %p78 = scmp.eq.s32.totalorder %s21, 1
      %p79 = por %p77, %p78
      %p81 = scmp.ne.s32.totalorder %s66, %s80
      %p82 = scmp.eq.s32.totalorder %s21, 0
      %p83 = por %p81, %p82
      %s85 = sadd.s32 %s84, 1
      %p88 = scmp.eq.s32.totalorder %s15, 1
      %p89 = scmp.ne.s32.totalorder %s84, %s86
      %p90 = scmp.eq.s32.totalorder %s15, 0
      %p91 = por %p89, %p90
      %p92 = scmp.ne.s32.totalorder %s84, %s86
      %p93 = scmp.eq.s32.totalorder %s20, 1
      %p94 = por %p92, %p93
      %p95 = scmp.ne.s32.totalorder %s86, %s87
      %p96 = scmp.eq.s32.totalorder %s20, 0
      %p97 = por %p95, %p96
      %p98 = scmp.ne.s32.totalorder %s86, %s87
      %p99 = scmp.eq.s32.totalorder %s21, 1
      %p100 = por %p98, %p99
      %p102 = scmp.ne.s32.totalorder %s87, %s101
      %p103 = scmp.eq.s32.totalorder %s21, 0
      %p104 = por %p102, %p103
      %s105 = ssub.s32 %s22, %s34
      %s106 = ssub.s32 %s23, %s30
      %s107 = sor.u32 %s105, %s106
      %p108 = scmp.eq.s32.totalorder %s107, 0
      %s110 = sadd.s32 %s109, 1
      %s111 = scalar_select %p108, %s109, %s110
      %p114 = pneg %p108
      %p115 = scmp.eq.s32.totalorder %s15, 1
      %p116 = por %p114, %p115
      %p117 = scmp.ne.s32.totalorder %s109, %s112
      %p118 = scmp.eq.s32.totalorder %s15, 0
      %p119 = por %p117, %p118
      %p120 = scmp.ne.s32.totalorder %s109, %s112
      %p121 = scmp.eq.s32.totalorder %s20, 1
      %p122 = por %p120, %p121
      %p123 = scmp.ne.s32.totalorder %s112, %s113
      %p124 = scmp.eq.s32.totalorder %s20, 0
      %p125 = por %p123, %p124
      %p126 = scmp.ne.s32.totalorder %s112, %s113
      %p127 = scmp.eq.s32.totalorder %s21, 1
      %p128 = por %p126, %p127
      %p130 = scmp.ne.s32.totalorder %s113, %s129
      %p131 = scmp.eq.s32.totalorder %s21, 0
      %p132 = por %p130, %p131
      %p133 = scmp.le.s32.totalorder 1, %s15
      %p134 = scmp.lt.s32.totalorder %s15, 3
      %p135 = pnand %p133, %p134
      %p136 = pneg %p135
      // Predicated region
      $region9: #{tpu_custom_call.1} parent=5 // pred_check
        _
      $region10: #{tpu_custom_call.1} parent=5 // pred_check_branch
        %138 = sbr.rel (%p135) target = $region12
      $region11: #{tpu_custom_call.1} parent=5 // pred_region
        %s139 = ssub.s32 %s15, 1
        // Predicated region
        $region13: #{tpu_custom_call.1} parent=11 // pred_check
          %p140 = pneg %p76
        $region14: #{tpu_custom_call.1} parent=11 // pred_check_branch
          %142 = sbr.rel (%p140) target = $region16
        $region15: #{tpu_custom_call.1} parent=11 // pred_region
          _
        $region16: #{tpu_custom_call.1} parent=11 // pred_fallthru
          _
        // Predicated region
        $region17: #{tpu_custom_call.1} parent=11 // pred_check
          %p143 = pneg %p97
        $region18: #{tpu_custom_call.1} parent=11 // pred_check_branch
          %145 = sbr.rel (%p143) target = $region20
        $region19: #{tpu_custom_call.1} parent=11 // pred_region
          _
        $region20: #{tpu_custom_call.1} parent=11 // pred_fallthru
          _
      $region12: #{tpu_custom_call.1} parent=5 // pred_fallthru
        _
      %p146 = scmp.lt.s32.totalorder %s15, 2
      // Predicated region
      $region21: #{tpu_custom_call.1} parent=5 // pred_check
        %p147 = pneg %p146
      $region22: #{tpu_custom_call.1} parent=5 // pred_check_branch
        %149 = sbr.rel (%p147) target = $region24
      $region23: #{tpu_custom_call.1} parent=5 // pred_region
        // Predicated region
        $region25: #{tpu_custom_call.1} parent=23 // pred_check
          %p150 = pneg %p49
        $region26: #{tpu_custom_call.1} parent=23 // pred_check_branch
          %152 = sbr.rel (%p150) target = $region28
        $region27: #{tpu_custom_call.1} parent=23 // pred_region
          %s153 = sand.u32 %s39, 1
          %s154 = scalar_lea.sflag [#allocation3], %s153
          %s155 = sand.u32 %s39, 1
          %s156 = smul.addr %s155, 8
          %s157 = scalar_lea.vmem [#allocation2], %s156
          %s158 = smul.u32 2, %s23
          %s160 = ssub.s32 128, 128
          %161 = vsyncadd %s154, %s160
          %s162 = smul.addr %s22, 2
          %s163 = sadd.s32 %s158, %s162
          %s164 = smul.addr %s163, 64
          %s165 = scalar_lea.hbm %s0, %s164
          %s167 = sshll.u32 %s157, 4
          %s168 = int_to_ptr.vmem [resolvable:$true] %s167
          %170 = dma.hbm_to_vmem [thread:$0]  %s165, 128, %s168, %s154
        $region28: #{tpu_custom_call.1} parent=23 // pred_fallthru
          _
      $region24: #{tpu_custom_call.1} parent=5 // pred_fallthru
        _
      %p171 = scmp.le.s32.totalorder 1, %s15
      %p172 = scmp.lt.s32.totalorder %s15, 3
      %p173 = pnand %p171, %p172
      %p174 = pneg %p173
      // Predicated region
      $region29: #{tpu_custom_call.1} parent=5 // pred_check
        _
      $region30: #{tpu_custom_call.1} parent=5 // pred_check_branch
        %176 = sbr.rel (%p173) target = $region32
      $region31: #{tpu_custom_call.1} parent=5 // pred_region
        %s177 = ssub.s32 %s15, 1
        %s178 = sand.u32 %s42, 1
        %s179 = scalar_lea.sflag [#allocation3], %s178
        %s180 = sand.u32 %s42, 1
        %s181 = smul.addr %s180, 8
        %s182 = scalar_lea.vmem [#allocation2], %s181
        // Predicated region
        $region33: #{tpu_custom_call.1} parent=31 // pred_check
          %p183 = pneg %p55
        $region34: #{tpu_custom_call.1} parent=31 // pred_check_branch
          %185 = sbr.rel (%p183) target = $region36
        $region35: #{tpu_custom_call.1} parent=31 // pred_region
          %186 = dma.done %s179, 128
        $region36: #{tpu_custom_call.1} parent=31 // pred_fallthru
          _
        %s187 = sand.u32 %s42, 1
        %s188 = scalar_lea.sflag [#allocation3], %s187
        %s189 = sand.u32 %s42, 1
        %s190 = smul.addr %s189, 8
        %s191 = scalar_lea.vmem [#allocation2], %s190
        %p192 = pneg %p55
        %p193 = pneg %p52
        %p194 = pneg %p76
        %p195 = pneg %p73
        %p196 = pneg %p97
        %p197 = pneg %p94
        %p198 = pneg %p125
        %p199 = pneg %p122
        %s200 = sand.u32 %s112, 1
        %s201 = scalar_lea.sflag [#allocation4], %s200
        %s202 = sand.u32 %s112, 1
        %s203 = smul.addr %s202, 4
        %s204 = scalar_lea.vmem [#allocation5], %s203
        %s205 = smul.u32 2, %s25
        %s206 = smul.u32 2, %s25
        %v207 = vld [vmem:[%s182] sm:$0xff]
        %v208 = vld [vmem:[%s1] sm:$0x3]
        %v209 = vld [vmem:[%s2] sm:$0x3]
        %211 = vset.pattern.permute.xlu0 0
        %212 = vperm.xlu0 %211, %v209
        %v213 = vpop.permute.xlu0 %212
        %v216 = vcombine.high %v207, %v207
        %vm217 = vcmask 31744
        %v219 = vsel %vm217, %v208, 0
        %vm221 = vcmask 1043456
        %v222 = vsel %vm221, %v207, 0
        %v224 = vsel %vm221, %v216, 0
        %226 = vmatprep.subr.mxu0 0.0
        %227 = vmatpush1.msra.mxu0 0.0
        %228 = vmatprep.subr.mxu0 0.0
        %229 = vmatpush1.msra.mxu0 0.0
        %230 = vmatprep.subr.mxu0 0.0
        %231 = vmatpush1.msra.mxu0 0.0
        %232 = vmatprep.subr.mxu0 0.0
        %233 = vmatpush1.msra.mxu0 0.0
        %234 = vmatprep.subr.mxu0 0.0
        %235 = vmatpush1.msra.mxu0 0.0
        %236 = vmatprep.subr.mxu0 0.0
        %237 = vmatpush1.msra.mxu0 0.0
        %238 = vmatprep.subr.mxu0 0.0
        %239 = vmatpush1.msra.mxu0 0.0
        %240 = vmatprep.subr.mxu0 0.0
        %241 = vmatpush1.msra.mxu0 0.0
        %242 = vmatprep.subr.mxu0 0.0
        %243 = vmatpush1.msra.mxu0 0.0
        %244 = vmatprep.subr.mxu0 0.0
        %245 = vmatpush1.msra.mxu0 0.0
        %246 = vmatprep.subr.mxu0 0.0
        %247 = vmatpush1.msra.mxu0 0.0
        %248 = vmatprep.subr.mxu0 0.0
        %249 = vmatpush1.msra.mxu0 0.0
        %250 = vmatprep.subr.mxu0 0.0
        %251 = vmatpush1.msra.mxu0 0.0
        %252 = vmatprep.subr.mxu0 0.0
        %253 = vmatpush1.msra.mxu0 0.0
        %254 = vmatprep.subr.mxu0 0.0
        %255 = vmatpush1.msra.mxu0 0.0
        %256 = vmatprep.subr.mxu0 %v224
        %257 = vmatpush1.msra.mxu0 %v222
        %258 = vmatprep.subr.mxu0 0.0
        %259 = vmatpush2.msra.mxu0 0.0
        %260 = vmatprep.subr.mxu0 0.0
        %261 = vmatpush2.msra.mxu0 0.0
        %262 = vmatprep.subr.mxu0 0.0
        %263 = vmatpush2.msra.mxu0 0.0
        %264 = vmatprep.subr.mxu0 0.0
        %265 = vmatpush2.msra.mxu0 0.0
        %266 = vmatprep.subr.mxu0 0.0
        %267 = vmatpush2.msra.mxu0 0.0
        %268 = vmatprep.subr.mxu0 0.0
        %269 = vmatpush2.msra.mxu0 0.0
        %270 = vmatprep.subr.mxu0 0.0
        %271 = vmatpush2.msra.mxu0 0.0
        %272 = vmatprep.subr.mxu0 0.0
        %273 = vmatpush2.msra.mxu0 0.0
        %274 = vmatprep.subr.mxu0 0.0
        %275 = vmatpush2.msra.mxu0 0.0
        %276 = vmatprep.subr.mxu0 0.0
        %277 = vmatpush2.msra.mxu0 0.0
        %278 = vmatprep.subr.mxu0 0.0
        %279 = vmatpush2.msra.mxu0 0.0
        %280 = vmatprep.subr.mxu0 0.0
        %281 = vmatpush2.msra.mxu0 0.0
        %282 = vmatprep.subr.mxu0 0.0
        %283 = vmatpush2.msra.mxu0 0.0
        %284 = vmatprep.subr.mxu0 0.0
        %285 = vmatpush2.msra.mxu0 0.0
        %286 = vmatprep.subr.mxu0 0.0
        %287 = vmatpush2.msra.mxu0 0.0
        %288 = vmatprep.subr.mxu0 0.0
        %289 = vmatpush2.msra.mxu0 0.0
        %290 = vmatprep.mubr.f32.mxu0 0.0
        %291 = vmatmul.mubr.f32.gmra.mxu0 %v219
        %v292 = vpop.f32.mrf.mxu0
        %v293 = vadd.f32 %v213, %v292
        %v294 = vpop.f32.mrf.mxu0
        %v295 = vadd.f32 %v213, %v294
        %296 = vdwg.mxu0
        %v299 = vcombine.low %v293, %v295
        %v301 = vunpack.c.l.s4 1983009808
        %v302 = vunpack.c.0.s8 %v301
        %v303 = vlaneseq
        %v304 = vshrl.u32 %v303, 7
        %v305 = vsub.s32 %v302, %v304
        %v306 = vrot.slane %v299, %v305
        %308 = vst [vmem:[%s204] sm:$0xf] %v306
        %s309 = sand.u32 %s112, 1
        %s310 = scalar_lea.sflag [#allocation4], %s309
        %s311 = sand.u32 %s112, 1
        %s312 = smul.addr %s311, 4
        %s313 = scalar_lea.vmem [#allocation5], %s312
        // Predicated region
        $region37: #{tpu_custom_call.1} parent=31 // pred_check
          %p314 = pneg %p122
        $region38: #{tpu_custom_call.1} parent=31 // pred_check_branch
          %316 = sbr.rel (%p314) target = $region40
        $region39: #{tpu_custom_call.1} parent=31 // pred_region
          %s317 = smul.u32 2, %s25
          %s319 = ssub.s32 64, 64
          %320 = vsyncadd %s310, %s319
          %s321 = smul.addr %s24, 2
          %s322 = sadd.s32 %s317, %s321
          %s323 = smul.addr %s322, 32
          %s324 = scalar_lea.hbm %s3, %s323
          %s326 = sshll.u32 %s313, 4
          %s327 = int_to_ptr.vmem [resolvable:$true] %s326
          %329 = dma.vmem_to_hbm [thread:$0]  %s327, 64, %s324, %s310
        $region40: #{tpu_custom_call.1} parent=31 // pred_fallthru
          _
      $region32: #{tpu_custom_call.1} parent=5 // pred_fallthru
        _
      %p330 = scmp.le.s32.totalorder 2, %s15
      // Predicated region
      $region41: #{tpu_custom_call.1} parent=5 // pred_check
        %p331 = pneg %p330
      $region42: #{tpu_custom_call.1} parent=5 // pred_check_branch
        %333 = sbr.rel (%p331) target = $region44
      $region43: #{tpu_custom_call.1} parent=5 // pred_region
        %s334 = ssub.s32 %s15, 2
        // Predicated region
        $region45: #{tpu_custom_call.1} parent=43 // pred_check
          %p335 = pneg %p128
        $region46: #{tpu_custom_call.1} parent=43 // pred_check_branch
          %337 = sbr.rel (%p335) target = $region48
        $region47: #{tpu_custom_call.1} parent=43 // pred_region
          %s338 = sand.u32 %s113, 1
          %s339 = scalar_lea.sflag [#allocation4], %s338
          %s340 = sand.u32 %s113, 1
          %s341 = smul.addr %s340, 4
          %s342 = scalar_lea.vmem [#allocation5], %s341
          %343 = dma.done %s339, 64
        $region48: #{tpu_custom_call.1} parent=43 // pred_fallthru
          _
      $region44: #{tpu_custom_call.1} parent=5 // pred_fallthru
        _
    $region6: #{tpu_custom_call.1} parent=1 // loop_footer
      %s19 = sadd.s32 1, %s15
    $region7: #{tpu_custom_call.1} parent=1 // loop_footer_branch
      %14 = sbr.rel target = $region3
    $region8: #{tpu_custom_call.1} parent=1 // loop_exit
      _
    %344 = vsyncpa [#allocation3], 1
    %s345 = scalar_lea.sflag [#allocation3], 1
    %346 = vsyncpa %s345, 1
    %347 = vsyncpa [#allocation4], 1
    %s348 = scalar_lea.sflag [#allocation4], 1
    %349 = vsyncpa %s348, 1

</llo_original>
